<compile_context>
chip_gen: v7x
topology: tpu7x:2x2x1
jax: 0.10.0
libtpu: 0.0.40
codegen_flags: <defaults>
</compile_context>

<pallas_src>
import jax
import jax.numpy as jnp
from jax.experimental import pallas as pl
from jax.experimental.pallas import tpu as pltpu


def _identity_kernel(x_ref, o_ref):
    # Pure pass-through of the resident VMEM tile.
    o_ref[...] = x_ref[...]


def _pick_layout(total, last_dim):
    """Pick a lane-dense (rows, lanes) flattening for the copy."""
    for lanes in (512, 256, 128):          # large multiple of 128 -> unmasked vst
        if total % lanes == 0:
            return total // lanes, lanes
    # Fallback: keep the original trailing dim as the lane axis.  The block is
    # full-extent in that dim, which is always a legal TPU block shape (stores
    # may be masked, but this path only triggers for odd small shapes).
    return total // last_dim, last_dim


def _pick_block_rows(rows):
    """Row-tile size: 512 rows ~ 85% of HBM copy roofline; full extent if small."""
    if rows <= 512:
        return rows                        # full extent: always legal
    return 512                             # 512 % 8 == 0 (and % 16/32 for packed dtypes)


def identity_forward(x, donate=False):
    """Identity forward: returns a tensor equal to x (same shape / dtype).

    donate=False (default): plain tiled HBM->HBM copy through VMEM.
    donate=True: aliases the output onto the input buffer (in-place
    writeback).  Only use when the caller will not read x again.
    """
    orig_shape = x.shape
    orig_dtype = x.dtype

    # Degenerate cases (0-d or empty): identity needs no data movement at all.
    if x.ndim == 0 or x.size == 0:
        return x

    total = x.size
    rows, lanes = _pick_layout(total, orig_shape[-1])
    block_rows = _pick_block_rows(rows)

    x2d = x.reshape(rows, lanes)           # contiguous reshape: free plumbing

    call_kwargs = {}
    if donate:
        # In-place writeback: only beneficial when x2d's buffer is donated by
        # the enclosing jit; otherwise XLA inserts a defensive copy first.
        call_kwargs["input_output_aliases"] = {0: 0}

    out = pl.pallas_call(
        _identity_kernel,
        out_shape=jax.ShapeDtypeStruct((rows, lanes), orig_dtype),
        grid=(pl.cdiv(rows, block_rows),),
        in_specs=[pl.BlockSpec((block_rows, lanes), lambda i: (i, 0))],
        out_specs=pl.BlockSpec((block_rows, lanes), lambda i: (i, 0)),
        compiler_params=pltpu.CompilerParams(
            # Row tiles are independent -> shard across TensorCores (v7x).
            dimension_semantics=("parallel",),
        ),
        **call_kwargs,
    )(x2d)

    return out.reshape(orig_shape)


class IdentityPallas:
    """Mirror of the PyTorch Identity module (no parameters)."""

    def __init__(self, opt=None):
        self.x = None

    def forward(self, x):
        self.x = identity_forward(x)
        return self.x

    def step(self, batch, set_):
        return {}

    def output(self):
        return self.x

    def save(self, path, epoch):
        pass

    def load(self, path):
        pass


if __name__ == "__main__":
    key = jax.random.PRNGKey(0)
    # NCHW input consistent with the module: batch=2, channels=4, spatial=16x16
    x = jax.random.normal(key, (2, 4, 16, 16), dtype=jnp.float32)

    model = IdentityPallas(opt=None)
    y = model.forward(x)
    y = jax.block_until_ready(y)

    assert y.shape == x.shape and y.dtype == x.dtype
    assert bool(jnp.all(y == x))
    print("KERNEL_OK")
</pallas_src>

<mosaic_0001>
module attributes {stable_mosaic.version = 11 : i64} {
  func.func @_identity_kernel(%arg0: i32, %arg1: memref<4x512xf32, #tpu.memory_space<vmem>>, %arg2: memref<4x512xf32, #tpu.memory_space<vmem>>) attributes {dimension_semantics = [#tpu.dimension_semantics<parallel>], iteration_bounds = array<i64: 1>, scalar_prefetch = 0 : i64, scratch_operands = 0 : i64, tpu.core_type = #tpu.core_type<tc>, window_params = [{transform_indices = @transform_0, window_bounds = array<i64: 4, 512>}, {transform_indices = @transform_1, window_bounds = array<i64: 4, 512>}]} {
    %c0 = arith.constant 0 : index
    %c0_0 = arith.constant 0 : index
    %0 = vector.load %arg1[%c0, %c0_0] : memref<4x512xf32, #tpu.memory_space<vmem>>, vector<4x512xf32>
    %c0_1 = arith.constant 0 : index
    %c0_2 = arith.constant 0 : index
    %1 = vector.load %arg2[%c0_1, %c0_2] : memref<4x512xf32, #tpu.memory_space<vmem>>, vector<4x512xf32>
    tpu.vector_store %arg2[%c0_1, %c0_2], %0 {strides = array<i32>} : memref<4x512xf32, #tpu.memory_space<vmem>>, vector<4x512xf32>,
    return
  }
  func.func @transform_0(%arg0: i32) -> (i32, i32) {
    %c0_i32 = arith.constant 0 : i32
    %c0_i32_0 = arith.constant 0 : i32
    return %arg0, %c0_i32 : i32, i32
  }
  func.func @transform_1(%arg0: i32) -> (i32, i32) {
    %c0_i32 = arith.constant 0 : i32
    %c0_i32_0 = arith.constant 0 : i32
    return %arg0, %c0_i32 : i32, i32
  }
}

</mosaic_0001>

<llo_original>
// kernel: tpu_custom_call.1
$region0: #{tpu_custom_call.1}
  #allocation0 [shape = 'u32[]', space=smem, size = 0x4, offset = 0x4, fixed_abs, tag = 'smem constant byte address 0x4 - core index']
  #allocation1 [shape = 'u32[144,128]{1,0:T(1,128)}', space=vmem, size = 0x12000, scoped, tag = 'internal scratch']
  %s0 = inlined_call_operand.hbm [shape: f32[4,512], index: 0, kind: input, shape index: {}]
  %s1 = inlined_call_operand.hbm [shape: f32[4,512], index: 1, kind: output, shape index: {}]
  %s2 = sld [smem:[#allocation0]]
  $region18: #{tpu_custom_call.1} parent=0
    _
  %s4 = ssub.s32 1, %s2
  %s5 = scalar_select 0, %s4, %s2
  $region1: #{tpu_custom_call.1} parent=0
    #allocation2 [shape = 'u8[8192]{0}', space=vmem, size = 0x2000, scoped, tag = 'input window, operand 0, single buffered']
    #allocation3 [shape = 's32[1]{0}', space=sflag, size = 0x4, scoped, tag = 'scoped memory for tpu_custom_call.1']
    #allocation4 [shape = 's32[1]{0}', space=sflag, size = 0x4, scoped, tag = 'scoped memory for tpu_custom_call.1']
    #allocation5 [shape = 'u8[8192]{0}', space=vmem, size = 0x2000, scoped, tag = 'output window, operand 0, single buffered']
    %6 = vsyncpa [#allocation3], 0
    %7 = vsyncpa [#allocation4], 0
    // Predicated region
    $region2: #{tpu_custom_call.1} parent=1 // pred_check
      _
    $region3: #{tpu_custom_call.1} parent=1 // pred_check_branch
      %9 = sbr.rel (0) target = $region5
    $region4: #{tpu_custom_call.1} parent=1 // pred_region
      %s11 = ssub.s32 256, 256
      %12 = vsyncadd [#allocation3], %s11
      %s14 = sshll.u32 [#allocation2], 4
      %s15 = int_to_ptr.vmem [resolvable:$true] %s14
      %17 = dma.hbm_to_vmem [thread:$0]  %s0, 256, %s15, [#allocation3]
    $region5: #{tpu_custom_call.1} parent=1 // pred_fallthru
      _
    // Predicated region
    $region6: #{tpu_custom_call.1} parent=1 // pred_check
      _
    $region7: #{tpu_custom_call.1} parent=1 // pred_check_branch
      %19 = sbr.rel (0) target = $region9
    $region8: #{tpu_custom_call.1} parent=1 // pred_region
      %20 = dma.done [#allocation3], 256
    $region9: #{tpu_custom_call.1} parent=1 // pred_fallthru
      _
    %v21 = vld [vmem:[#allocation2] sm:$0xff]
    %v22 = vld [vmem:[#allocation2 + $0x8] sm:$0xff]
    %23 = vst [vmem:[#allocation5] sm:$0xff] %v21
    %24 = vst [vmem:[#allocation5 + $0x8] sm:$0xff] %v22
    // Predicated region
    $region10: #{tpu_custom_call.1} parent=1 // pred_check
      _
    $region11: #{tpu_custom_call.1} parent=1 // pred_check_branch
      %26 = sbr.rel (0) target = $region13
    $region12: #{tpu_custom_call.1} parent=1 // pred_region
      %s28 = ssub.s32 256, 256
      %29 = vsyncadd [#allocation4], %s28
      %s31 = sshll.u32 [#allocation5], 4
      %s32 = int_to_ptr.vmem [resolvable:$true] %s31
      %34 = dma.vmem_to_hbm [thread:$0]  %s32, 256, %s1, [#allocation4]
    $region13: #{tpu_custom_call.1} parent=1 // pred_fallthru
      _
    // Predicated region
    $region14: #{tpu_custom_call.1} parent=1 // pred_check
      _
    $region15: #{tpu_custom_call.1} parent=1 // pred_check_branch
      %36 = sbr.rel (0) target = $region17
    $region16: #{tpu_custom_call.1} parent=1 // pred_region
      %37 = dma.done [#allocation4], 256
    $region17: #{tpu_custom_call.1} parent=1 // pred_fallthru
      _
    %38 = vsyncpa [#allocation3], 1
    %39 = vsyncpa [#allocation4], 1

</llo_original>
